<compile_context>
chip_gen: v7x
topology: tpu7x:2x2x1
jax: 0.10.0
libtpu: 0.0.40
codegen_flags: <defaults>
</compile_context>

<pallas_src>
import jax
import jax.numpy as jnp
from jax.experimental import pallas as pl
from jax.experimental.pallas import tpu as pltpu

IN_FEATURES = 5
HIDDEN = 10

_LANES = 128
_SUBLANES = 8
_UNIT = _LANES * _SUBLANES  # 1024: minimum batch granularity (8x128 tile)


def _mlp_kernel(x_ref, w1_ref, b1_ref, w2_ref, b2_ref, o_ref):
    """One batch tile.

    x_ref: (5, R, 128) VMEM — feature k is a dense (R, 128) slab of the batch.
    o_ref: (R, 128) VMEM    — fc2 output for the same batch slab.
    Weights/biases live in SMEM; the 5->10->1 MLP is a short scalar-broadcast
    FMA chain on the VPU (the MXU would be >95% padding at these widths). The
    (10, R, 128) hidden layer is never materialized.
    """
    # Load each feature slab once: five dense (R, 128) tiles.
    x_rows = [x_ref[k] for k in range(IN_FEATURES)]

    def hidden_j(j):
        # Fold bias + k=0 term into the initializer (saves zeros+add per j).
        h = w1_ref[j] * x_rows[0] + b1_ref[j]          # w1[0, j]
        for k in range(1, IN_FEATURES):
            h = h + w1_ref[k * HIDDEN + j] * x_rows[k]  # w1[k, j]
        return jnp.maximum(h, 0.0)

    # Fold b2 + j=0 term into the output initializer.
    y = w2_ref[0] * hidden_j(0) + b2_ref[0]
    for j in range(1, HIDDEN):
        y = y + w2_ref[j] * hidden_j(j)

    o_ref[...] = y.astype(o_ref.dtype)


def article_sentiment_nn(x, w1, b1, w2, b2, *, tile_b=65536):
    """Forward pass of ArticleSentimentNN.

    x : (B, 5) float32
    w1: (5, 10), b1: (10,), w2: (10,), b2: (1,)
    returns (B, 1) float32
    """
    B = x.shape[0]
    assert x.shape[1] == IN_FEATURES
    assert tile_b >= _UNIT, "tile_b must be at least 1024 (8 sublanes x 128 lanes)"

    # --- tile / grid derivation (batch padded to 1024-element units) --------
    b_pad = ((B + _UNIT - 1) // _UNIT) * _UNIT
    n_units = b_pad // _UNIT
    tile_units = max(1, min(tile_b // _UNIT, n_units))
    # v7x: keep >= 2 grid steps when the batch allows it so the "parallel"
    # axis can shard across both TensorCores (no cost on 1-TC v5e/v6e).
    if tile_units == n_units and n_units >= 2:
        tile_units = (n_units + 1) // 2
    tile = tile_units * _UNIT
    assert tile % _UNIT == 0
    grid_len = (n_units + tile_units - 1) // tile_units
    b_pad = grid_len * tile
    R = tile // _LANES  # sublane rows per tile (multiple of 8)

    # --- layout plumbing (wrapper side) -------------------------------------
    # NOTE: the (B, 5) -> (5, B) transpose is a separate XLA relayout = one
    # extra HBM pass over x. Provide feature-major input upstream to avoid it.
    if b_pad != B:
        x = jnp.pad(x, ((0, b_pad - B), (0, 0)))
    x_t = x.T.reshape(IN_FEATURES, b_pad // _LANES, _LANES)

    flops = 2 * b_pad * (IN_FEATURES * HIDDEN + HIDDEN)
    bytes_accessed = (b_pad * (IN_FEATURES + 1) * 4
                      + (IN_FEATURES * HIDDEN + 2 * HIDDEN + 1) * 4)

    out_t = pl.pallas_call(
        _mlp_kernel,
        out_shape=jax.ShapeDtypeStruct((b_pad // _LANES, _LANES), x.dtype),
        grid=(grid_len,),
        in_specs=[
            pl.BlockSpec((IN_FEATURES, R, _LANES), lambda i: (0, i, 0)),  # x
            pl.BlockSpec(memory_space=pltpu.MemorySpace.SMEM),            # w1 (50,)
            pl.BlockSpec(memory_space=pltpu.MemorySpace.SMEM),            # b1
            pl.BlockSpec(memory_space=pltpu.MemorySpace.SMEM),            # w2
            pl.BlockSpec(memory_space=pltpu.MemorySpace.SMEM),            # b2
        ],
        out_specs=pl.BlockSpec((R, _LANES), lambda i: (i, 0)),
        compiler_params=pltpu.CompilerParams(
            dimension_semantics=("parallel",),
            # Dense layout keeps even 128K-element tiles well under the scoped
            # default, but give explicit headroom (~16 MiB) for large tile_b.
            vmem_limit_bytes=16 * 1024 * 1024),
        cost_estimate=pl.CostEstimate(
            flops=flops, transcendentals=0, bytes_accessed=bytes_accessed),
    )(x_t, w1.reshape(-1), b1, w2, b2)

    # (b_pad//128, 128) lane/sublane-dense result -> (B, 1), row order kept.
    return out_t.reshape(b_pad)[:B][:, None]


def init_params(key):
    """Deterministic parameter init matching the module's shapes.

    PyTorch Linear(in, out) has weight (out, in), bias (out,). We store w1
    transposed as (in, out) so the kernel computes x @ W1 directly.
    """
    k1, k2, k3, k4 = jax.random.split(key, 4)
    w1 = jax.random.normal(k1, (IN_FEATURES, HIDDEN), jnp.float32) * 0.1
    b1 = jax.random.normal(k2, (HIDDEN,), jnp.float32) * 0.1
    w2 = jax.random.normal(k3, (HIDDEN,), jnp.float32) * 0.1
    b2 = jax.random.normal(k4, (1,), jnp.float32) * 0.1
    return w1, b1, w2, b2


if __name__ == "__main__":
    key = jax.random.PRNGKey(0)
    k_x, k_p = jax.random.split(key)

    B = 8  # small demo batch (padded to one 1024-element tile in the wrapper)
    x = jax.random.normal(k_x, (B, IN_FEATURES), jnp.float32)
    w1, b1, w2, b2 = init_params(k_p)

    out = jax.block_until_ready(article_sentiment_nn(x, w1, b1, w2, b2))

    # Pure-JAX reference check of the forward semantics.
    ref = jnp.maximum(x @ w1 + b1[None, :], 0.0) @ w2[:, None] + b2[0]
    assert out.shape == (B, 1)
    assert jnp.allclose(out, ref, atol=1e-5, rtol=1e-5)

    # Also exercise a multi-tile batch (forces grid > 1, padding path).
    B2 = 3000
    x2 = jax.random.normal(k_x, (B2, IN_FEATURES), jnp.float32)
    out2 = jax.block_until_ready(
        article_sentiment_nn(x2, w1, b1, w2, b2, tile_b=2048))
    ref2 = jnp.maximum(x2 @ w1 + b1[None, :], 0.0) @ w2[:, None] + b2[0]
    assert out2.shape == (B2, 1)
    assert jnp.allclose(out2, ref2, atol=1e-5, rtol=1e-5)

    print("KERNEL_OK")
</pallas_src>

<mosaic_0001>
module attributes {stable_mosaic.version = 11 : i64} {
  func.func @_mlp_kernel(%arg0: i32, %arg1: memref<5x8x128xf32, #tpu.memory_space<vmem>>, %arg2: memref<50xf32, #tpu.memory_space<smem>>, %arg3: memref<10xf32, #tpu.memory_space<smem>>, %arg4: memref<10xf32, #tpu.memory_space<smem>>, %arg5: memref<1xf32, #tpu.memory_space<smem>>, %arg6: memref<8x128xf32, #tpu.memory_space<vmem>>) attributes {dimension_semantics = [#tpu.dimension_semantics<parallel>], iteration_bounds = array<i64: 1>, scalar_prefetch = 0 : i64, scratch_operands = 0 : i64, tpu.core_type = #tpu.core_type<tc>, window_params = [{transform_indices = @transform_0, window_bounds = array<i64: 5, 8, 128>}, {transform_indices = @transform_1, window_bounds = array<i64: 50>}, {transform_indices = @transform_2, window_bounds = array<i64: 10>}, {transform_indices = @transform_3, window_bounds = array<i64: 10>}, {transform_indices = @transform_4, window_bounds = array<i64: 1>}, {transform_indices = @transform_5, window_bounds = array<i64: 8, 128>}]} {
    %c0 = arith.constant 0 : index
    %c0_0 = arith.constant 0 : index
    %c0_1 = arith.constant 0 : index
    %0 = vector.load %arg1[%c0, %c0_0, %c0_1] : memref<5x8x128xf32, #tpu.memory_space<vmem>>, vector<1x8x128xf32>
    %1 = vector.shape_cast %0 : vector<1x8x128xf32> to vector<8x128xf32>
    %c1 = arith.constant 1 : index
    %c0_2 = arith.constant 0 : index
    %c0_3 = arith.constant 0 : index
    %2 = vector.load %arg1[%c1, %c0_2, %c0_3] : memref<5x8x128xf32, #tpu.memory_space<vmem>>, vector<1x8x128xf32>
    %3 = vector.shape_cast %2 : vector<1x8x128xf32> to vector<8x128xf32>
    %c2 = arith.constant 2 : index
    %c0_4 = arith.constant 0 : index
    %c0_5 = arith.constant 0 : index
    %4 = vector.load %arg1[%c2, %c0_4, %c0_5] : memref<5x8x128xf32, #tpu.memory_space<vmem>>, vector<1x8x128xf32>
    %5 = vector.shape_cast %4 : vector<1x8x128xf32> to vector<8x128xf32>
    %c3 = arith.constant 3 : index
    %c0_6 = arith.constant 0 : index
    %c0_7 = arith.constant 0 : index
    %6 = vector.load %arg1[%c3, %c0_6, %c0_7] : memref<5x8x128xf32, #tpu.memory_space<vmem>>, vector<1x8x128xf32>
    %7 = vector.shape_cast %6 : vector<1x8x128xf32> to vector<8x128xf32>
    %c4 = arith.constant 4 : index
    %c0_8 = arith.constant 0 : index
    %c0_9 = arith.constant 0 : index
    %8 = vector.load %arg1[%c4, %c0_8, %c0_9] : memref<5x8x128xf32, #tpu.memory_space<vmem>>, vector<1x8x128xf32>
    %9 = vector.shape_cast %8 : vector<1x8x128xf32> to vector<8x128xf32>
    %c0_10 = arith.constant 0 : index
    %10 = memref.load %arg4[%c0_10] : memref<10xf32, #tpu.memory_space<smem>>
    %c0_11 = arith.constant 0 : index
    %11 = memref.load %arg2[%c0_11] : memref<50xf32, #tpu.memory_space<smem>>
    %12 = vector.broadcast %11 : f32 to vector<8x128xf32>
    %13 = arith.mulf %12, %1 : vector<8x128xf32>
    %c0_12 = arith.constant 0 : index
    %14 = memref.load %arg3[%c0_12] : memref<10xf32, #tpu.memory_space<smem>>
    %15 = vector.broadcast %14 : f32 to vector<8x128xf32>
    %16 = arith.addf %13, %15 : vector<8x128xf32>
    %c10 = arith.constant 10 : index
    %17 = memref.load %arg2[%c10] : memref<50xf32, #tpu.memory_space<smem>>
    %18 = vector.broadcast %17 : f32 to vector<8x128xf32>
    %19 = arith.mulf %18, %3 : vector<8x128xf32>
    %20 = arith.addf %16, %19 : vector<8x128xf32>
    %c20 = arith.constant 20 : index
    %21 = memref.load %arg2[%c20] : memref<50xf32, #tpu.memory_space<smem>>
    %22 = vector.broadcast %21 : f32 to vector<8x128xf32>
    %23 = arith.mulf %22, %5 : vector<8x128xf32>
    %24 = arith.addf %20, %23 : vector<8x128xf32>
    %c30 = arith.constant 30 : index
    %25 = memref.load %arg2[%c30] : memref<50xf32, #tpu.memory_space<smem>>
    %26 = vector.broadcast %25 : f32 to vector<8x128xf32>
    %27 = arith.mulf %26, %7 : vector<8x128xf32>
    %28 = arith.addf %24, %27 : vector<8x128xf32>
    %c40 = arith.constant 40 : index
    %29 = memref.load %arg2[%c40] : memref<50xf32, #tpu.memory_space<smem>>
    %30 = vector.broadcast %29 : f32 to vector<8x128xf32>
    %31 = arith.mulf %30, %9 : vector<8x128xf32>
    %32 = arith.addf %28, %31 : vector<8x128xf32>
    %cst = arith.constant 0.000000e+00 : f32
    %33 = vector.broadcast %cst : f32 to vector<8x128xf32>
    %34 = arith.maximumf %32, %33 : vector<8x128xf32>
    %35 = vector.broadcast %10 : f32 to vector<8x128xf32>
    %36 = arith.mulf %35, %34 : vector<8x128xf32>
    %c0_13 = arith.constant 0 : index
    %37 = memref.load %arg5[%c0_13] : memref<1xf32, #tpu.memory_space<smem>>
    %38 = vector.broadcast %37 : f32 to vector<8x128xf32>
    %39 = arith.addf %36, %38 : vector<8x128xf32>
    %c1_14 = arith.constant 1 : index
    %40 = memref.load %arg4[%c1_14] : memref<10xf32, #tpu.memory_space<smem>>
    %c1_15 = arith.constant 1 : index
    %41 = memref.load %arg2[%c1_15] : memref<50xf32, #tpu.memory_space<smem>>
    %42 = vector.broadcast %41 : f32 to vector<8x128xf32>
    %43 = arith.mulf %42, %1 : vector<8x128xf32>
    %c1_16 = arith.constant 1 : index
    %44 = memref.load %arg3[%c1_16] : memref<10xf32, #tpu.memory_space<smem>>
    %45 = vector.broadcast %44 : f32 to vector<8x128xf32>
    %46 = arith.addf %43, %45 : vector<8x128xf32>
    %c11 = arith.constant 11 : index
    %47 = memref.load %arg2[%c11] : memref<50xf32, #tpu.memory_space<smem>>
    %48 = vector.broadcast %47 : f32 to vector<8x128xf32>
    %49 = arith.mulf %48, %3 : vector<8x128xf32>
    %50 = arith.addf %46, %49 : vector<8x128xf32>
    %c21 = arith.constant 21 : index
    %51 = memref.load %arg2[%c21] : memref<50xf32, #tpu.memory_space<smem>>
    %52 = vector.broadcast %51 : f32 to vector<8x128xf32>
    %53 = arith.mulf %52, %5 : vector<8x128xf32>
    %54 = arith.addf %50, %53 : vector<8x128xf32>
    %c31 = arith.constant 31 : index
    %55 = memref.load %arg2[%c31] : memref<50xf32, #tpu.memory_space<smem>>
    %56 = vector.broadcast %55 : f32 to vector<8x128xf32>
    %57 = arith.mulf %56, %7 : vector<8x128xf32>
    %58 = arith.addf %54, %57 : vector<8x128xf32>
    %c41 = arith.constant 41 : index
    %59 = memref.load %arg2[%c41] : memref<50xf32, #tpu.memory_space<smem>>
    %60 = vector.broadcast %59 : f32 to vector<8x128xf32>
    %61 = arith.mulf %60, %9 : vector<8x128xf32>
    %62 = arith.addf %58, %61 : vector<8x128xf32>
    %cst_17 = arith.constant 0.000000e+00 : f32
    %63 = vector.broadcast %cst_17 : f32 to vector<8x128xf32>
    %64 = arith.maximumf %62, %63 : vector<8x128xf32>
    %65 = vector.broadcast %40 : f32 to vector<8x128xf32>
    %66 = arith.mulf %65, %64 : vector<8x128xf32>
    %67 = arith.addf %39, %66 : vector<8x128xf32>
    %c2_18 = arith.constant 2 : index
    %68 = memref.load %arg4[%c2_18] : memref<10xf32, #tpu.memory_space<smem>>
    %c2_19 = arith.constant 2 : index
    %69 = memref.load %arg2[%c2_19] : memref<50xf32, #tpu.memory_space<smem>>
    %70 = vector.broadcast %69 : f32 to vector<8x128xf32>
    %71 = arith.mulf %70, %1 : vector<8x128xf32>
    %c2_20 = arith.constant 2 : index
    %72 = memref.load %arg3[%c2_20] : memref<10xf32, #tpu.memory_space<smem>>
    %73 = vector.broadcast %72 : f32 to vector<8x128xf32>
    %74 = arith.addf %71, %73 : vector<8x128xf32>
    %c12 = arith.constant 12 : index
    %75 = memref.load %arg2[%c12] : memref<50xf32, #tpu.memory_space<smem>>
    %76 = vector.broadcast %75 : f32 to vector<8x128xf32>
    %77 = arith.mulf %76, %3 : vector<8x128xf32>
    %78 = arith.addf %74, %77 : vector<8x128xf32>
    %c22 = arith.constant 22 : index
    %79 = memref.load %arg2[%c22] : memref<50xf32, #tpu.memory_space<smem>>
    %80 = vector.broadcast %79 : f32 to vector<8x128xf32>
    %81 = arith.mulf %80, %5 : vector<8x128xf32>
    %82 = arith.addf %78, %81 : vector<8x128xf32>
    %c32 = arith.constant 32 : index
    %83 = memref.load %arg2[%c32] : memref<50xf32, #tpu.memory_space<smem>>
    %84 = vector.broadcast %83 : f32 to vector<8x128xf32>
    %85 = arith.mulf %84, %7 : vector<8x128xf32>
    %86 = arith.addf %82, %85 : vector<8x128xf32>
    %c42 = arith.constant 42 : index
    %87 = memref.load %arg2[%c42] : memref<50xf32, #tpu.memory_space<smem>>
    %88 = vector.broadcast %87 : f32 to vector<8x128xf32>
    %89 = arith.mulf %88, %9 : vector<8x128xf32>
    %90 = arith.addf %86, %89 : vector<8x128xf32>
    %cst_21 = arith.constant 0.000000e+00 : f32
    %91 = vector.broadcast %cst_21 : f32 to vector<8x128xf32>
    %92 = arith.maximumf %90, %91 : vector<8x128xf32>
    %93 = vector.broadcast %68 : f32 to vector<8x128xf32>
    %94 = arith.mulf %93, %92 : vector<8x128xf32>
    %95 = arith.addf %67, %94 : vector<8x128xf32>
    %c3_22 = arith.constant 3 : index
    %96 = memref.load %arg4[%c3_22] : memref<10xf32, #tpu.memory_space<smem>>
    %c3_23 = arith.constant 3 : index
    %97 = memref.load %arg2[%c3_23] : memref<50xf32, #tpu.memory_space<smem>>
    %98 = vector.broadcast %97 : f32 to vector<8x128xf32>
    %99 = arith.mulf %98, %1 : vector<8x128xf32>
    %c3_24 = arith.constant 3 : index
    %100 = memref.load %arg3[%c3_24] : memref<10xf32, #tpu.memory_space<smem>>
    %101 = vector.broadcast %100 : f32 to vector<8x128xf32>
    %102 = arith.addf %99, %101 : vector<8x128xf32>
    %c13 = arith.constant 13 : index
    %103 = memref.load %arg2[%c13] : memref<50xf32, #tpu.memory_space<smem>>
    %104 = vector.broadcast %103 : f32 to vector<8x128xf32>
    %105 = arith.mulf %104, %3 : vector<8x128xf32>
    %106 = arith.addf %102, %105 : vector<8x128xf32>
    %c23 = arith.constant 23 : index
    %107 = memref.load %arg2[%c23] : memref<50xf32, #tpu.memory_space<smem>>
    %108 = vector.broadcast %107 : f32 to vector<8x128xf32>
    %109 = arith.mulf %108, %5 : vector<8x128xf32>
    %110 = arith.addf %106, %109 : vector<8x128xf32>
    %c33 = arith.constant 33 : index
    %111 = memref.load %arg2[%c33] : memref<50xf32, #tpu.memory_space<smem>>
    %112 = vector.broadcast %111 : f32 to vector<8x128xf32>
    %113 = arith.mulf %112, %7 : vector<8x128xf32>
    %114 = arith.addf %110, %113 : vector<8x128xf32>
    %c43 = arith.constant 43 : index
    %115 = memref.load %arg2[%c43] : memref<50xf32, #tpu.memory_space<smem>>
    %116 = vector.broadcast %115 : f32 to vector<8x128xf32>
    %117 = arith.mulf %116, %9 : vector<8x128xf32>
    %118 = arith.addf %114, %117 : vector<8x128xf32>
    %cst_25 = arith.constant 0.000000e+00 : f32
    %119 = vector.broadcast %cst_25 : f32 to vector<8x128xf32>
    %120 = arith.maximumf %118, %119 : vector<8x128xf32>
    %121 = vector.broadcast %96 : f32 to vector<8x128xf32>
    %122 = arith.mulf %121, %120 : vector<8x128xf32>
    %123 = arith.addf %95, %122 : vector<8x128xf32>
    %c4_26 = arith.constant 4 : index
    %124 = memref.load %arg4[%c4_26] : memref<10xf32, #tpu.memory_space<smem>>
    %c4_27 = arith.constant 4 : index
    %125 = memref.load %arg2[%c4_27] : memref<50xf32, #tpu.memory_space<smem>>
    %126 = vector.broadcast %125 : f32 to vector<8x128xf32>
    %127 = arith.mulf %126, %1 : vector<8x128xf32>
    %c4_28 = arith.constant 4 : index
    %128 = memref.load %arg3[%c4_28] : memref<10xf32, #tpu.memory_space<smem>>
    %129 = vector.broadcast %128 : f32 to vector<8x128xf32>
    %130 = arith.addf %127, %129 : vector<8x128xf32>
    %c14 = arith.constant 14 : index
    %131 = memref.load %arg2[%c14] : memref<50xf32, #tpu.memory_space<smem>>
    %132 = vector.broadcast %131 : f32 to vector<8x128xf32>
    %133 = arith.mulf %132, %3 : vector<8x128xf32>
    %134 = arith.addf %130, %133 : vector<8x128xf32>
    %c24 = arith.constant 24 : index
    %135 = memref.load %arg2[%c24] : memref<50xf32, #tpu.memory_space<smem>>
    %136 = vector.broadcast %135 : f32 to vector<8x128xf32>
    %137 = arith.mulf %136, %5 : vector<8x128xf32>
    %138 = arith.addf %134, %137 : vector<8x128xf32>
    %c34 = arith.constant 34 : index
    %139 = memref.load %arg2[%c34] : memref<50xf32, #tpu.memory_space<smem>>
    %140 = vector.broadcast %139 : f32 to vector<8x128xf32>
    %141 = arith.mulf %140, %7 : vector<8x128xf32>
    %142 = arith.addf %138, %141 : vector<8x128xf32>
    %c44 = arith.constant 44 : index
    %143 = memref.load %arg2[%c44] : memref<50xf32, #tpu.memory_space<smem>>
    %144 = vector.broadcast %143 : f32 to vector<8x128xf32>
    %145 = arith.mulf %144, %9 : vector<8x128xf32>
    %146 = arith.addf %142, %145 : vector<8x128xf32>
    %cst_29 = arith.constant 0.000000e+00 : f32
    %147 = vector.broadcast %cst_29 : f32 to vector<8x128xf32>
    %148 = arith.maximumf %146, %147 : vector<8x128xf32>
    %149 = vector.broadcast %124 : f32 to vector<8x128xf32>
    %150 = arith.mulf %149, %148 : vector<8x128xf32>
    %151 = arith.addf %123, %150 : vector<8x128xf32>
    %c5 = arith.constant 5 : index
    %152 = memref.load %arg4[%c5] : memref<10xf32, #tpu.memory_space<smem>>
    %c5_30 = arith.constant 5 : index
    %153 = memref.load %arg2[%c5_30] : memref<50xf32, #tpu.memory_space<smem>>
    %154 = vector.broadcast %153 : f32 to vector<8x128xf32>
    %155 = arith.mulf %154, %1 : vector<8x128xf32>
    %c5_31 = arith.constant 5 : index
    %156 = memref.load %arg3[%c5_31] : memref<10xf32, #tpu.memory_space<smem>>
    %157 = vector.broadcast %156 : f32 to vector<8x128xf32>
    %158 = arith.addf %155, %157 : vector<8x128xf32>
    %c15 = arith.constant 15 : index
    %159 = memref.load %arg2[%c15] : memref<50xf32, #tpu.memory_space<smem>>
    %160 = vector.broadcast %159 : f32 to vector<8x128xf32>
    %161 = arith.mulf %160, %3 : vector<8x128xf32>
    %162 = arith.addf %158, %161 : vector<8x128xf32>
    %c25 = arith.constant 25 : index
    %163 = memref.load %arg2[%c25] : memref<50xf32, #tpu.memory_space<smem>>
    %164 = vector.broadcast %163 : f32 to vector<8x128xf32>
    %165 = arith.mulf %164, %5 : vector<8x128xf32>
    %166 = arith.addf %162, %165 : vector<8x128xf32>
    %c35 = arith.constant 35 : index
    %167 = memref.load %arg2[%c35] : memref<50xf32, #tpu.memory_space<smem>>
    %168 = vector.broadcast %167 : f32 to vector<8x128xf32>
    %169 = arith.mulf %168, %7 : vector<8x128xf32>
    %170 = arith.addf %166, %169 : vector<8x128xf32>
    %c45 = arith.constant 45 : index
    %171 = memref.load %arg2[%c45] : memref<50xf32, #tpu.memory_space<smem>>
    %172 = vector.broadcast %171 : f32 to vector<8x128xf32>
    %173 = arith.mulf %172, %9 : vector<8x128xf32>
    %174 = arith.addf %170, %173 : vector<8x128xf32>
    %cst_32 = arith.constant 0.000000e+00 : f32
    %175 = vector.broadcast %cst_32 : f32 to vector<8x128xf32>
    %176 = arith.maximumf %174, %175 : vector<8x128xf32>
    %177 = vector.broadcast %152 : f32 to vector<8x128xf32>
    %178 = arith.mulf %177, %176 : vector<8x128xf32>
    %179 = arith.addf %151, %178 : vector<8x128xf32>
    %c6 = arith.constant 6 : index
    %180 = memref.load %arg4[%c6] : memref<10xf32, #tpu.memory_space<smem>>
    %c6_33 = arith.constant 6 : index
    %181 = memref.load %arg2[%c6_33] : memref<50xf32, #tpu.memory_space<smem>>
    %182 = vector.broadcast %181 : f32 to vector<8x128xf32>
    %183 = arith.mulf %182, %1 : vector<8x128xf32>
    %c6_34 = arith.constant 6 : index
    %184 = memref.load %arg3[%c6_34] : memref<10xf32, #tpu.memory_space<smem>>
    %185 = vector.broadcast %184 : f32 to vector<8x128xf32>
    %186 = arith.addf %183, %185 : vector<8x128xf32>
    %c16 = arith.constant 16 : index
    %187 = memref.load %arg2[%c16] : memref<50xf32, #tpu.memory_space<smem>>
    %188 = vector.broadcast %187 : f32 to vector<8x128xf32>
    %189 = arith.mulf %188, %3 : vector<8x128xf32>
    %190 = arith.addf %186, %189 : vector<8x128xf32>
    %c26 = arith.constant 26 : index
    %191 = memref.load %arg2[%c26] : memref<50xf32, #tpu.memory_space<smem>>
    %192 = vector.broadcast %191 : f32 to vector<8x128xf32>
    %193 = arith.mulf %192, %5 : vector<8x128xf32>
    %194 = arith.addf %190, %193 : vector<8x128xf32>
    %c36 = arith.constant 36 : index
    %195 = memref.load %arg2[%c36] : memref<50xf32, #tpu.memory_space<smem>>
    %196 = vector.broadcast %195 : f32 to vector<8x128xf32>
    %197 = arith.mulf %196, %7 : vector<8x128xf32>
    %198 = arith.addf %194, %197 : vector<8x128xf32>
    %c46 = arith.constant 46 : index
    %199 = memref.load %arg2[%c46] : memref<50xf32, #tpu.memory_space<smem>>
    %200 = vector.broadcast %199 : f32 to vector<8x128xf32>
    %201 = arith.mulf %200, %9 : vector<8x128xf32>
    %202 = arith.addf %198, %201 : vector<8x128xf32>
    %cst_35 = arith.constant 0.000000e+00 : f32
    %203 = vector.broadcast %cst_35 : f32 to vector<8x128xf32>
    %204 = arith.maximumf %202, %203 : vector<8x128xf32>
    %205 = vector.broadcast %180 : f32 to vector<8x128xf32>
    %206 = arith.mulf %205, %204 : vector<8x128xf32>
    %207 = arith.addf %179, %206 : vector<8x128xf32>
    %c7 = arith.constant 7 : index
    %208 = memref.load %arg4[%c7] : memref<10xf32, #tpu.memory_space<smem>>
    %c7_36 = arith.constant 7 : index
    %209 = memref.load %arg2[%c7_36] : memref<50xf32, #tpu.memory_space<smem>>
    %210 = vector.broadcast %209 : f32 to vector<8x128xf32>
    %211 = arith.mulf %210, %1 : vector<8x128xf32>
    %c7_37 = arith.constant 7 : index
    %212 = memref.load %arg3[%c7_37] : memref<10xf32, #tpu.memory_space<smem>>
    %213 = vector.broadcast %212 : f32 to vector<8x128xf32>
    %214 = arith.addf %211, %213 : vector<8x128xf32>
    %c17 = arith.constant 17 : index
    %215 = memref.load %arg2[%c17] : memref<50xf32, #tpu.memory_space<smem>>
    %216 = vector.broadcast %215 : f32 to vector<8x128xf32>
    %217 = arith.mulf %216, %3 : vector<8x128xf32>
    %218 = arith.addf %214, %217 : vector<8x128xf32>
    %c27 = arith.constant 27 : index
    %219 = memref.load %arg2[%c27] : memref<50xf32, #tpu.memory_space<smem>>
    %220 = vector.broadcast %219 : f32 to vector<8x128xf32>
    %221 = arith.mulf %220, %5 : vector<8x128xf32>
    %222 = arith.addf %218, %221 : vector<8x128xf32>
    %c37 = arith.constant 37 : index
    %223 = memref.load %arg2[%c37] : memref<50xf32, #tpu.memory_space<smem>>
    %224 = vector.broadcast %223 : f32 to vector<8x128xf32>
    %225 = arith.mulf %224, %7 : vector<8x128xf32>
    %226 = arith.addf %222, %225 : vector<8x128xf32>
    %c47 = arith.constant 47 : index
    %227 = memref.load %arg2[%c47] : memref<50xf32, #tpu.memory_space<smem>>
    %228 = vector.broadcast %227 : f32 to vector<8x128xf32>
    %229 = arith.mulf %228, %9 : vector<8x128xf32>
    %230 = arith.addf %226, %229 : vector<8x128xf32>
    %cst_38 = arith.constant 0.000000e+00 : f32
    %231 = vector.broadcast %cst_38 : f32 to vector<8x128xf32>
    %232 = arith.maximumf %230, %231 : vector<8x128xf32>
    %233 = vector.broadcast %208 : f32 to vector<8x128xf32>
    %234 = arith.mulf %233, %232 : vector<8x128xf32>
    %235 = arith.addf %207, %234 : vector<8x128xf32>
    %c8 = arith.constant 8 : index
    %236 = memref.load %arg4[%c8] : memref<10xf32, #tpu.memory_space<smem>>
    %c8_39 = arith.constant 8 : index
    %237 = memref.load %arg2[%c8_39] : memref<50xf32, #tpu.memory_space<smem>>
    %238 = vector.broadcast %237 : f32 to vector<8x128xf32>
    %239 = arith.mulf %238, %1 : vector<8x128xf32>
    %c8_40 = arith.constant 8 : index
    %240 = memref.load %arg3[%c8_40] : memref<10xf32, #tpu.memory_space<smem>>
    %241 = vector.broadcast %240 : f32 to vector<8x128xf32>
    %242 = arith.addf %239, %241 : vector<8x128xf32>
    %c18 = arith.constant 18 : index
    %243 = memref.load %arg2[%c18] : memref<50xf32, #tpu.memory_space<smem>>
    %244 = vector.broadcast %243 : f32 to vector<8x128xf32>
    %245 = arith.mulf %244, %3 : vector<8x128xf32>
    %246 = arith.addf %242, %245 : vector<8x128xf32>
    %c28 = arith.constant 28 : index
    %247 = memref.load %arg2[%c28] : memref<50xf32, #tpu.memory_space<smem>>
    %248 = vector.broadcast %247 : f32 to vector<8x128xf32>
    %249 = arith.mulf %248, %5 : vector<8x128xf32>
    %250 = arith.addf %246, %249 : vector<8x128xf32>
    %c38 = arith.constant 38 : index
    %251 = memref.load %arg2[%c38] : memref<50xf32, #tpu.memory_space<smem>>
    %252 = vector.broadcast %251 : f32 to vector<8x128xf32>
    %253 = arith.mulf %252, %7 : vector<8x128xf32>
    %254 = arith.addf %250, %253 : vector<8x128xf32>
    %c48 = arith.constant 48 : index
    %255 = memref.load %arg2[%c48] : memref<50xf32, #tpu.memory_space<smem>>
    %256 = vector.broadcast %255 : f32 to vector<8x128xf32>
    %257 = arith.mulf %256, %9 : vector<8x128xf32>
    %258 = arith.addf %254, %257 : vector<8x128xf32>
    %cst_41 = arith.constant 0.000000e+00 : f32
    %259 = vector.broadcast %cst_41 : f32 to vector<8x128xf32>
    %260 = arith.maximumf %258, %259 : vector<8x128xf32>
    %261 = vector.broadcast %236 : f32 to vector<8x128xf32>
    %262 = arith.mulf %261, %260 : vector<8x128xf32>
    %263 = arith.addf %235, %262 : vector<8x128xf32>
    %c9 = arith.constant 9 : index
    %264 = memref.load %arg4[%c9] : memref<10xf32, #tpu.memory_space<smem>>
    %c9_42 = arith.constant 9 : index
    %265 = memref.load %arg2[%c9_42] : memref<50xf32, #tpu.memory_space<smem>>
    %266 = vector.broadcast %265 : f32 to vector<8x128xf32>
    %267 = arith.mulf %266, %1 : vector<8x128xf32>
    %c9_43 = arith.constant 9 : index
    %268 = memref.load %arg3[%c9_43] : memref<10xf32, #tpu.memory_space<smem>>
    %269 = vector.broadcast %268 : f32 to vector<8x128xf32>
    %270 = arith.addf %267, %269 : vector<8x128xf32>
    %c19 = arith.constant 19 : index
    %271 = memref.load %arg2[%c19] : memref<50xf32, #tpu.memory_space<smem>>
    %272 = vector.broadcast %271 : f32 to vector<8x128xf32>
    %273 = arith.mulf %272, %3 : vector<8x128xf32>
    %274 = arith.addf %270, %273 : vector<8x128xf32>
    %c29 = arith.constant 29 : index
    %275 = memref.load %arg2[%c29] : memref<50xf32, #tpu.memory_space<smem>>
    %276 = vector.broadcast %275 : f32 to vector<8x128xf32>
    %277 = arith.mulf %276, %5 : vector<8x128xf32>
    %278 = arith.addf %274, %277 : vector<8x128xf32>
    %c39 = arith.constant 39 : index
    %279 = memref.load %arg2[%c39] : memref<50xf32, #tpu.memory_space<smem>>
    %280 = vector.broadcast %279 : f32 to vector<8x128xf32>
    %281 = arith.mulf %280, %7 : vector<8x128xf32>
    %282 = arith.addf %278, %281 : vector<8x128xf32>
    %c49 = arith.constant 49 : index
    %283 = memref.load %arg2[%c49] : memref<50xf32, #tpu.memory_space<smem>>
    %284 = vector.broadcast %283 : f32 to vector<8x128xf32>
    %285 = arith.mulf %284, %9 : vector<8x128xf32>
    %286 = arith.addf %282, %285 : vector<8x128xf32>
    %cst_44 = arith.constant 0.000000e+00 : f32
    %287 = vector.broadcast %cst_44 : f32 to vector<8x128xf32>
    %288 = arith.maximumf %286, %287 : vector<8x128xf32>
    %289 = vector.broadcast %264 : f32 to vector<8x128xf32>
    %290 = arith.mulf %289, %288 : vector<8x128xf32>
    %291 = arith.addf %263, %290 : vector<8x128xf32>
    %c0_45 = arith.constant 0 : index
    %c0_46 = arith.constant 0 : index
    %292 = vector.load %arg6[%c0_45, %c0_46] : memref<8x128xf32, #tpu.memory_space<vmem>>, vector<8x128xf32>
    tpu.vector_store %arg6[%c0_45, %c0_46], %291 {strides = array<i32>} : memref<8x128xf32, #tpu.memory_space<vmem>>, vector<8x128xf32>,
    return
  }
  func.func @transform_0(%arg0: i32) -> (i32, i32, i32) {
    %c0_i32 = arith.constant 0 : i32
    %c0_i32_0 = arith.constant 0 : i32
    %c0_i32_1 = arith.constant 0 : i32
    return %c0_i32, %arg0, %c0_i32_0 : i32, i32, i32
  }
  func.func @transform_1(%arg0: i32) -> i32 {
    %c0_i32 = arith.constant 0 : i32
    %c0_i32_0 = arith.constant 0 : i32
    return %c0_i32 : i32
  }
  func.func @transform_2(%arg0: i32) -> i32 {
    %c0_i32 = arith.constant 0 : i32
    %c0_i32_0 = arith.constant 0 : i32
    return %c0_i32 : i32
  }
  func.func @transform_3(%arg0: i32) -> i32 {
    %c0_i32 = arith.constant 0 : i32
    %c0_i32_0 = arith.constant 0 : i32
    return %c0_i32 : i32
  }
  func.func @transform_4(%arg0: i32) -> i32 {
    %c0_i32 = arith.constant 0 : i32
    %c0_i32_0 = arith.constant 0 : i32
    return %c0_i32 : i32
  }
  func.func @transform_5(%arg0: i32) -> (i32, i32) {
    %c0_i32 = arith.constant 0 : i32
    %c0_i32_0 = arith.constant 0 : i32
    return %arg0, %c0_i32 : i32, i32
  }
}

</mosaic_0001>

<llo_original>
// kernel: tpu_custom_call.1
$region0: #{tpu_custom_call.1}
  #allocation0 [shape = 'u32[]', space=smem, size = 0x4, offset = 0x4, fixed_abs, tag = 'smem constant byte address 0x4 - core index']
  #allocation1 [shape = 'u32[144,128]{1,0:T(1,128)}', space=vmem, size = 0x12000, scoped, tag = 'internal scratch']
  #allocation2 [shape = 'f32[1]{0:T(128)S(6)}', space=smem, size = 0x200, scoped, tag = 'scoped memory for tpu_custom_call.1']
  %s0 = inlined_call_operand.hbm [shape: f32[5,8,128], index: 0, kind: input, shape index: {}]
  %s1 = inlined_call_operand.vmem [shape: f32[50], index: 1, kind: input, shape index: {}]
  %s2 = inlined_call_operand.vmem [shape: f32[10], index: 2, kind: input, shape index: {}]
  %s3 = inlined_call_operand.vmem [shape: f32[10], index: 3, kind: input, shape index: {}]
  %s4 = inlined_call_operand.<no memory space> [shape: f32[1], index: 4, kind: input, shape index: {}]
  %s5 = inlined_call_operand.hbm [shape: f32[8,128], index: 5, kind: output, shape index: {}]
  %s6 = sld [smem:[#allocation0]]
  $region46: #{tpu_custom_call.1} parent=0
    _
  %s8 = ssub.s32 1, %s6
  %s9 = scalar_select 0, %s8, %s6
  %10 = sst [smem:[#allocation2]] %s4
  $region1: #{tpu_custom_call.1} parent=0
    #allocation3 [shape = 'u8[20480]{0}', space=vmem, size = 0x5000, scoped, tag = 'input window, operand 0, single buffered']
    #allocation4 [shape = 's32[1]{0}', space=sflag, size = 0x4, scoped, tag = 'scoped memory for tpu_custom_call.1']
    #allocation5 [shape = 's32[1]{0}', space=sflag, size = 0x4, scoped, tag = 'scoped memory for tpu_custom_call.1']
    #allocation6 [shape = 's32[1]{0}', space=sflag, size = 0x4, scoped, tag = 'scoped memory for tpu_custom_call.1']
    #allocation7 [shape = 'u8[512]{0}', space=smem, size = 0x200, scoped, tag = 'input window, operand 1, single buffered']
    #allocation8 [shape = 'u8[512]{0}', space=smem, size = 0x200, scoped, tag = 'input window, operand 2, single buffered']
    #allocation9 [shape = 's32[1]{0}', space=sflag, size = 0x4, scoped, tag = 'scoped memory for tpu_custom_call.1']
    #allocation10 [shape = 'u8[512]{0}', space=smem, size = 0x200, scoped, tag = 'input window, operand 3, single buffered']
    #allocation11 [shape = 'u8[4096]{0}', space=vmem, size = 0x1000, scoped, tag = 'output window, operand 0, single buffered']
    %11 = vsyncpa [#allocation4], 0
    %12 = vsyncpa [#allocation6], 0
    %13 = vsyncpa [#allocation9], 0
    %14 = vsyncpa [#allocation5], 0
    // Predicated region
    $region2: #{tpu_custom_call.1} parent=1 // pred_check
      _
    $region3: #{tpu_custom_call.1} parent=1 // pred_check_branch
      %16 = sbr.rel (0) target = $region5
    $region4: #{tpu_custom_call.1} parent=1 // pred_region
      %s18 = ssub.s32 640, 640
      %19 = vsyncadd [#allocation4], %s18
      %s20 = sshll.u32 [#allocation3], 4
      %s21 = int_to_ptr.vmem [resolvable:$true] %s20
      %26 = dma.hbm_to_vmem [thread:$0]  %s0, 640, %s21, [#allocation4], 128, 128, 8
    $region5: #{tpu_custom_call.1} parent=1 // pred_fallthru
      _
    // Predicated region
    $region6: #{tpu_custom_call.1} parent=1 // pred_check
      _
    $region7: #{tpu_custom_call.1} parent=1 // pred_check_branch
      %28 = sbr.rel (0) target = $region9
    $region8: #{tpu_custom_call.1} parent=1 // pred_region
      %s30 = ssub.s32 16, 16
      %31 = vsyncadd [#allocation6], %s30
      %s33 = sshll.u32 %s1, 4
      %s34 = int_to_ptr.vmem [resolvable:$true] %s33
      %36 = dma.vmem_to_smem %s34, 16, [#allocation7], [#allocation6]
    $region9: #{tpu_custom_call.1} parent=1 // pred_fallthru
      _
    // Predicated region
    $region10: #{tpu_custom_call.1} parent=1 // pred_check
      _
    $region11: #{tpu_custom_call.1} parent=1 // pred_check_branch
      %38 = sbr.rel (0) target = $region13
    $region12: #{tpu_custom_call.1} parent=1 // pred_region
      %s40 = ssub.s32 16, 16
      %41 = vsyncadd [#allocation9], %s40
      %s43 = sshll.u32 %s2, 4
      %s44 = int_to_ptr.vmem [resolvable:$true] %s43
      %46 = dma.vmem_to_smem %s44, 16, [#allocation8], [#allocation9]
    $region13: #{tpu_custom_call.1} parent=1 // pred_fallthru
      _
    // Predicated region
    $region14: #{tpu_custom_call.1} parent=1 // pred_check
      _
    $region15: #{tpu_custom_call.1} parent=1 // pred_check_branch
      %48 = sbr.rel (0) target = $region17
    $region16: #{tpu_custom_call.1} parent=1 // pred_region
      %s50 = ssub.s32 16, 16
      %51 = vsyncadd [#allocation9], %s50
      %s53 = sshll.u32 %s3, 4
      %s54 = int_to_ptr.vmem [resolvable:$true] %s53
      %56 = dma.vmem_to_smem %s54, 16, [#allocation10], [#allocation9]
    $region17: #{tpu_custom_call.1} parent=1 // pred_fallthru
      _
    // Predicated region
    $region18: #{tpu_custom_call.1} parent=1 // pred_check
      _
    $region19: #{tpu_custom_call.1} parent=1 // pred_check_branch
      %58 = sbr.rel (0) target = $region21
    $region20: #{tpu_custom_call.1} parent=1 // pred_region
      _
    $region21: #{tpu_custom_call.1} parent=1 // pred_fallthru
      _
    // Predicated region
    $region22: #{tpu_custom_call.1} parent=1 // pred_check
      _
    $region23: #{tpu_custom_call.1} parent=1 // pred_check_branch
      %60 = sbr.rel (0) target = $region25
    $region24: #{tpu_custom_call.1} parent=1 // pred_region
      %61 = dma.done [#allocation4], 640
    $region25: #{tpu_custom_call.1} parent=1 // pred_fallthru
      _
    // Predicated region
    $region26: #{tpu_custom_call.1} parent=1 // pred_check
      _
    $region27: #{tpu_custom_call.1} parent=1 // pred_check_branch
      %63 = sbr.rel (0) target = $region29
    $region28: #{tpu_custom_call.1} parent=1 // pred_region
      %64 = dma.done [#allocation6], 16
    $region29: #{tpu_custom_call.1} parent=1 // pred_fallthru
      _
    // Predicated region
    $region30: #{tpu_custom_call.1} parent=1 // pred_check
      _
    $region31: #{tpu_custom_call.1} parent=1 // pred_check_branch
      %66 = sbr.rel (0) target = $region33
    $region32: #{tpu_custom_call.1} parent=1 // pred_region
      %67 = dma.done [#allocation9], 16
    $region33: #{tpu_custom_call.1} parent=1 // pred_fallthru
      _
    // Predicated region
    $region34: #{tpu_custom_call.1} parent=1 // pred_check
      _
    $region35: #{tpu_custom_call.1} parent=1 // pred_check_branch
      %69 = sbr.rel (0) target = $region37
    $region36: #{tpu_custom_call.1} parent=1 // pred_region
      %70 = dma.done [#allocation9], 16
    $region37: #{tpu_custom_call.1} parent=1 // pred_fallthru
      _
    %71 = sfence
    %v72 = vld [vmem:[#allocation3] sm:$0xff]
    %s73 = scalar_lea.vmem [#allocation3], 8
    %v74 = vld [vmem:[%s73] sm:$0xff]
    %s75 = scalar_lea.vmem [#allocation3], 16
    %v76 = vld [vmem:[%s75] sm:$0xff]
    %s77 = scalar_lea.vmem [#allocation3], 24
    %v78 = vld [vmem:[%s77] sm:$0xff]
    %s79 = scalar_lea.vmem [#allocation3], 32
    %v80 = vld [vmem:[%s79] sm:$0xff]
    %s81 = sld [smem:[#allocation10]]
    %s82 = sld [smem:[#allocation7]]
    %v83 = vstv %s82
    %v84 = vmul.f32 %v83, %v72
    %s85 = sld [smem:[#allocation8]]
    %v86 = vstv %s85
    %v87 = vadd.f32 %v84, %v86
    %s88 = sld [smem:[#allocation7 + $0xa]]
    %v89 = vstv %s88
    %v90 = vmul.f32 %v89, %v74
    %v91 = vadd.f32 %v87, %v90
    %s92 = sld [smem:[#allocation7 + $0x14]]
    %v93 = vstv %s92
    %v94 = vmul.f32 %v93, %v76
    %v95 = vadd.f32 %v91, %v94
    %s96 = sld [smem:[#allocation7 + $0x1e]]
    %v97 = vstv %s96
    %v98 = vmul.f32 %v97, %v78
    %v99 = vadd.f32 %v95, %v98
    %s100 = sld [smem:[#allocation7 + $0x28]]
    %v101 = vstv %s100
    %v102 = vmul.f32 %v101, %v80
    %v103 = vadd.f32 %v99, %v102
    %v104 = vmax.f32 %v103, 0.0
    %v105 = vstv %s81
    %v106 = vmul.f32 %v105, %v104
    %s107 = sld [smem:[#allocation2]]
    %v108 = vstv %s107
    %v109 = vadd.f32 %v106, %v108
    %s110 = sld [smem:[#allocation10 + $0x1]]
    %s111 = sld [smem:[#allocation7 + $0x1]]
    %v112 = vstv %s111
    %v113 = vmul.f32 %v112, %v72
    %s114 = sld [smem:[#allocation8 + $0x1]]
    %v115 = vstv %s114
    %v116 = vadd.f32 %v113, %v115
    %s117 = sld [smem:[#allocation7 + $0xb]]
    %v118 = vstv %s117
    %v119 = vmul.f32 %v118, %v74
    %v120 = vadd.f32 %v116, %v119
    %s121 = sld [smem:[#allocation7 + $0x15]]
    %v122 = vstv %s121
    %v123 = vmul.f32 %v122, %v76
    %v124 = vadd.f32 %v120, %v123
    %s125 = sld [smem:[#allocation7 + $0x1f]]
    %v126 = vstv %s125
    %v127 = vmul.f32 %v126, %v78
    %v128 = vadd.f32 %v124, %v127
    %s129 = sld [smem:[#allocation7 + $0x29]]
    %v130 = vstv %s129
    %v131 = vmul.f32 %v130, %v80
    %v132 = vadd.f32 %v128, %v131
    %v133 = vmax.f32 %v132, 0.0
    %v134 = vstv %s110
    %v135 = vmul.f32 %v134, %v133
    %v136 = vadd.f32 %v109, %v135
    %s137 = sld [smem:[#allocation10 + $0x2]]
    %s138 = sld [smem:[#allocation7 + $0x2]]
    %v139 = vstv %s138
    %v140 = vmul.f32 %v139, %v72
    %s141 = sld [smem:[#allocation8 + $0x2]]
    %v142 = vstv %s141
    %v143 = vadd.f32 %v140, %v142
    %s144 = sld [smem:[#allocation7 + $0xc]]
    %v145 = vstv %s144
    %v146 = vmul.f32 %v145, %v74
    %v147 = vadd.f32 %v143, %v146
    %s148 = sld [smem:[#allocation7 + $0x16]]
    %v149 = vstv %s148
    %v150 = vmul.f32 %v149, %v76
    %v151 = vadd.f32 %v147, %v150
    %s152 = sld [smem:[#allocation7 + $0x20]]
    %v153 = vstv %s152
    %v154 = vmul.f32 %v153, %v78
    %v155 = vadd.f32 %v151, %v154
    %s156 = sld [smem:[#allocation7 + $0x2a]]
    %v157 = vstv %s156
    %v158 = vmul.f32 %v157, %v80
    %v159 = vadd.f32 %v155, %v158
    %v160 = vmax.f32 %v159, 0.0
    %v161 = vstv %s137
    %v162 = vmul.f32 %v161, %v160
    %v163 = vadd.f32 %v136, %v162
    %s164 = sld [smem:[#allocation10 + $0x3]]
    %s165 = sld [smem:[#allocation7 + $0x3]]
    %v166 = vstv %s165
    %v167 = vmul.f32 %v166, %v72
    %s168 = sld [smem:[#allocation8 + $0x3]]
    %v169 = vstv %s168
    %v170 = vadd.f32 %v167, %v169
    %s171 = sld [smem:[#allocation7 + $0xd]]
    %v172 = vstv %s171
    %v173 = vmul.f32 %v172, %v74
    %v174 = vadd.f32 %v170, %v173
    %s175 = sld [smem:[#allocation7 + $0x17]]
    %v176 = vstv %s175
    %v177 = vmul.f32 %v176, %v76
    %v178 = vadd.f32 %v174, %v177
    %s179 = sld [smem:[#allocation7 + $0x21]]
    %v180 = vstv %s179
    %v181 = vmul.f32 %v180, %v78
    %v182 = vadd.f32 %v178, %v181
    %s183 = sld [smem:[#allocation7 + $0x2b]]
    %v184 = vstv %s183
    %v185 = vmul.f32 %v184, %v80
    %v186 = vadd.f32 %v182, %v185
    %v187 = vmax.f32 %v186, 0.0
    %v188 = vstv %s164
    %v189 = vmul.f32 %v188, %v187
    %v190 = vadd.f32 %v163, %v189
    %s191 = sld [smem:[#allocation10 + $0x4]]
    %s192 = sld [smem:[#allocation7 + $0x4]]
    %v193 = vstv %s192
    %v194 = vmul.f32 %v193, %v72
    %s195 = sld [smem:[#allocation8 + $0x4]]
    %v196 = vstv %s195
    %v197 = vadd.f32 %v194, %v196
    %s198 = sld [smem:[#allocation7 + $0xe]]
    %v199 = vstv %s198
    %v200 = vmul.f32 %v199, %v74
    %v201 = vadd.f32 %v197, %v200
    %s202 = sld [smem:[#allocation7 + $0x18]]
    %v203 = vstv %s202
    %v204 = vmul.f32 %v203, %v76
    %v205 = vadd.f32 %v201, %v204
    %s206 = sld [smem:[#allocation7 + $0x22]]
    %v207 = vstv %s206
    %v208 = vmul.f32 %v207, %v78
    %v209 = vadd.f32 %v205, %v208
    %s210 = sld [smem:[#allocation7 + $0x2c]]
    %v211 = vstv %s210
    %v212 = vmul.f32 %v211, %v80
    %v213 = vadd.f32 %v209, %v212
    %v214 = vmax.f32 %v213, 0.0
    %v215 = vstv %s191
    %v216 = vmul.f32 %v215, %v214
    %v217 = vadd.f32 %v190, %v216
    %s218 = sld [smem:[#allocation10 + $0x5]]
    %s219 = sld [smem:[#allocation7 + $0x5]]
    %v220 = vstv %s219
    %v221 = vmul.f32 %v220, %v72
    %s222 = sld [smem:[#allocation8 + $0x5]]
    %v223 = vstv %s222
    %v224 = vadd.f32 %v221, %v223
    %s225 = sld [smem:[#allocation7 + $0xf]]
    %v226 = vstv %s225
    %v227 = vmul.f32 %v226, %v74
    %v228 = vadd.f32 %v224, %v227
    %s229 = sld [smem:[#allocation7 + $0x19]]
    %v230 = vstv %s229
    %v231 = vmul.f32 %v230, %v76
    %v232 = vadd.f32 %v228, %v231
    %s233 = sld [smem:[#allocation7 + $0x23]]
    %v234 = vstv %s233
    %v235 = vmul.f32 %v234, %v78
    %v236 = vadd.f32 %v232, %v235
    %s237 = sld [smem:[#allocation7 + $0x2d]]
    %v238 = vstv %s237
    %v239 = vmul.f32 %v238, %v80
    %v240 = vadd.f32 %v236, %v239
    %v241 = vmax.f32 %v240, 0.0
    %v242 = vstv %s218
    %v243 = vmul.f32 %v242, %v241
    %v244 = vadd.f32 %v217, %v243
    %s245 = sld [smem:[#allocation10 + $0x6]]
    %s246 = sld [smem:[#allocation7 + $0x6]]
    %v247 = vstv %s246
    %v248 = vmul.f32 %v247, %v72
    %s249 = sld [smem:[#allocation8 + $0x6]]
    %v250 = vstv %s249
    %v251 = vadd.f32 %v248, %v250
    %s252 = sld [smem:[#allocation7 + $0x10]]
    %v253 = vstv %s252
    %v254 = vmul.f32 %v253, %v74
    %v255 = vadd.f32 %v251, %v254
    %s256 = sld [smem:[#allocation7 + $0x1a]]
    %v257 = vstv %s256
    %v258 = vmul.f32 %v257, %v76
    %v259 = vadd.f32 %v255, %v258
    %s260 = sld [smem:[#allocation7 + $0x24]]
    %v261 = vstv %s260
    %v262 = vmul.f32 %v261, %v78
    %v263 = vadd.f32 %v259, %v262
    %s264 = sld [smem:[#allocation7 + $0x2e]]
    %v265 = vstv %s264
    %v266 = vmul.f32 %v265, %v80
    %v267 = vadd.f32 %v263, %v266
    %v268 = vmax.f32 %v267, 0.0
    %v269 = vstv %s245
    %v270 = vmul.f32 %v269, %v268
    %v271 = vadd.f32 %v244, %v270
    %s272 = sld [smem:[#allocation10 + $0x7]]
    %s273 = sld [smem:[#allocation7 + $0x7]]
    %v274 = vstv %s273
    %v275 = vmul.f32 %v274, %v72
    %s276 = sld [smem:[#allocation8 + $0x7]]
    %v277 = vstv %s276
    %v278 = vadd.f32 %v275, %v277
    %s279 = sld [smem:[#allocation7 + $0x11]]
    %v280 = vstv %s279
    %v281 = vmul.f32 %v280, %v74
    %v282 = vadd.f32 %v278, %v281
    %s283 = sld [smem:[#allocation7 + $0x1b]]
    %v284 = vstv %s283
    %v285 = vmul.f32 %v284, %v76
    %v286 = vadd.f32 %v282, %v285
    %s287 = sld [smem:[#allocation7 + $0x25]]
    %v288 = vstv %s287
    %v289 = vmul.f32 %v288, %v78
    %v290 = vadd.f32 %v286, %v289
    %s291 = sld [smem:[#allocation7 + $0x2f]]
    %v292 = vstv %s291
    %v293 = vmul.f32 %v292, %v80
    %v294 = vadd.f32 %v290, %v293
    %v295 = vmax.f32 %v294, 0.0
    %v296 = vstv %s272
    %v297 = vmul.f32 %v296, %v295
    %v298 = vadd.f32 %v271, %v297
    %s299 = sld [smem:[#allocation10 + $0x8]]
    %s300 = sld [smem:[#allocation7 + $0x8]]
    %v301 = vstv %s300
    %v302 = vmul.f32 %v301, %v72
    %s303 = sld [smem:[#allocation8 + $0x8]]
    %v304 = vstv %s303
    %v305 = vadd.f32 %v302, %v304
    %s306 = sld [smem:[#allocation7 + $0x12]]
    %v307 = vstv %s306
    %v308 = vmul.f32 %v307, %v74
    %v309 = vadd.f32 %v305, %v308
    %s310 = sld [smem:[#allocation7 + $0x1c]]
    %v311 = vstv %s310
    %v312 = vmul.f32 %v311, %v76
    %v313 = vadd.f32 %v309, %v312
    %s314 = sld [smem:[#allocation7 + $0x26]]
    %v315 = vstv %s314
    %v316 = vmul.f32 %v315, %v78
    %v317 = vadd.f32 %v313, %v316
    %s318 = sld [smem:[#allocation7 + $0x30]]
    %v319 = vstv %s318
    %v320 = vmul.f32 %v319, %v80
    %v321 = vadd.f32 %v317, %v320
    %v322 = vmax.f32 %v321, 0.0
    %v323 = vstv %s299
    %v324 = vmul.f32 %v323, %v322
    %v325 = vadd.f32 %v298, %v324
    %s326 = sld [smem:[#allocation10 + $0x9]]
    %s327 = sld [smem:[#allocation7 + $0x9]]
    %v328 = vstv %s327
    %v329 = vmul.f32 %v328, %v72
    %s330 = sld [smem:[#allocation8 + $0x9]]
    %v331 = vstv %s330
    %v332 = vadd.f32 %v329, %v331
    %s333 = sld [smem:[#allocation7 + $0x13]]
    %v334 = vstv %s333
    %v335 = vmul.f32 %v334, %v74
    %v336 = vadd.f32 %v332, %v335
    %s337 = sld [smem:[#allocation7 + $0x1d]]
    %v338 = vstv %s337
    %v339 = vmul.f32 %v338, %v76
    %v340 = vadd.f32 %v336, %v339
    %s341 = sld [smem:[#allocation7 + $0x27]]
    %v342 = vstv %s341
    %v343 = vmul.f32 %v342, %v78
    %v344 = vadd.f32 %v340, %v343
    %s345 = sld [smem:[#allocation7 + $0x31]]
    %v346 = vstv %s345
    %v347 = vmul.f32 %v346, %v80
    %v348 = vadd.f32 %v344, %v347
    %v349 = vmax.f32 %v348, 0.0
    %v350 = vstv %s326
    %v351 = vmul.f32 %v350, %v349
    %v352 = vadd.f32 %v325, %v351
    %353 = vst [vmem:[#allocation11] sm:$0xff] %v352
    // Predicated region
    $region38: #{tpu_custom_call.1} parent=1 // pred_check
      _
    $region39: #{tpu_custom_call.1} parent=1 // pred_check_branch
      %355 = sbr.rel (0) target = $region41
    $region40: #{tpu_custom_call.1} parent=1 // pred_region
      %s357 = ssub.s32 128, 128
      %358 = vsyncadd [#allocation5], %s357
      %s360 = sshll.u32 [#allocation11], 4
      %s361 = int_to_ptr.vmem [resolvable:$true] %s360
      %363 = dma.vmem_to_hbm [thread:$0]  %s361, 128, %s5, [#allocation5]
    $region41: #{tpu_custom_call.1} parent=1 // pred_fallthru
      _
    // Predicated region
    $region42: #{tpu_custom_call.1} parent=1 // pred_check
      _
    $region43: #{tpu_custom_call.1} parent=1 // pred_check_branch
      %365 = sbr.rel (0) target = $region45
    $region44: #{tpu_custom_call.1} parent=1 // pred_region
      %366 = dma.done [#allocation5], 128
    $region45: #{tpu_custom_call.1} parent=1 // pred_fallthru
      _
    %367 = vsyncpa [#allocation4], 1
    %368 = vsyncpa [#allocation5], 1
    %369 = vsyncpa [#allocation6], 1
    %370 = vsyncpa [#allocation9], 1

</llo_original>
